<compile_context>
chip_gen: v5e
topology: v5e:2x2
jax: 0.10.0
libtpu: 0.0.40
codegen_flags: <defaults>
</compile_context>

<pallas_src>
import functools

import numpy as np
import jax
import jax.numpy as jnp
from jax.experimental import pallas as pl
from jax.experimental.pallas import tpu as pltpu


def _round_up(x, m):
    return -(-x // m) * m


def _make_stencil_constants(H, W):
    """Constant linear operators: 4x4 avg-pool fused with directional stencils."""
    Hp, Wp = H // 4, W // 4

    # Separable 4x4 average pooling; each side carries a factor 1/4.
    PhS = np.zeros((Hp, H), np.float32)
    for p in range(Hp):
        PhS[p, 4 * p:4 * p + 4] = 0.25
    PwS = np.zeros((W, Wp), np.float32)
    for q in range(Wp):
        PwS[4 * q:4 * q + 4, q] = 0.25

    # Zero-padded neighbour shifts on the pooled grid (match F.conv2d padding=1).
    SL = np.zeros((Wp, Wp), np.float32); SL[np.arange(Wp - 1), np.arange(1, Wp)] = 1.0
    SR = np.zeros((Wp, Wp), np.float32); SR[np.arange(1, Wp), np.arange(Wp - 1)] = 1.0
    SU = np.zeros((Hp, Hp), np.float32); SU[np.arange(Hp - 1), np.arange(1, Hp)] = 1.0
    SD = np.zeros((Hp, Hp), np.float32); SD[np.arange(1, Hp), np.arange(Hp - 1)] = 1.0
    Iw = np.eye(Wp, dtype=np.float32)
    Ih = np.eye(Hp, dtype=np.float32)

    # Compose (pool o directional-difference) into single constant matrices,
    # then fuse directions: one right-operator and one left-operator.
    PwL = PwS @ (Iw - SL)          # (W, Wp)
    PwR = PwS @ (Iw - SR)          # (W, Wp)
    PhU = (Ih - SU) @ PhS          # (Hp, H)
    PhD = (Ih - SD) @ PhS          # (Hp, H)

    PwAll = np.concatenate([PwS, PwL, PwR], axis=1)   # (W, 3*Wp)
    PhAll = np.concatenate([PhS, PhU, PhD], axis=0)   # (3*Hp, H)
    return jnp.asarray(PhAll), jnp.asarray(PwAll)


@functools.lru_cache(maxsize=1)
def _vmem_budget():
    """(scoped vmem limit, input/intermediate budget, physical vmem) per generation."""
    phys = 64 << 20
    try:
        info = pltpu.get_tpu_info()
        phys = int(getattr(info, "vmem_capacity_bytes", phys)) or phys
    except Exception:
        pass
    # v5e/v6e: 128 MiB physical -> limit 96 MiB, budget ~57 MiB.
    # v7x:      64 MiB physical -> limit 48 MiB, budget ~28 MiB.
    limit = min((phys * 3) // 4, 100 << 20)
    limit = max(limit, 32 << 20)
    budget = (limit * 3) // 5
    return limit, budget, phys


def _per_image_vmem_bytes(C, H, W):
    """Padding-aware VMEM footprint of one image worth of work (f32)."""
    Hp, Wp = H // 4, W // 4
    Hpad, Wpad = _round_up(H, 8), _round_up(W, 128)
    img = C * Hpad * Wpad * 4                          # one padded input image
    d_tmp = 3 * Hpad * Wpad * 4                        # channel means + diff
    x_tmp = Hpad * _round_up(3 * Wp, 128) * 4          # (H, 3Wp)
    ph_b = _round_up(3 * Hp, 8) * _round_up(H, 128) * 4  # broadcast PhAll slice
    z_tmp = _round_up(3 * Hp, 8) * _round_up(3 * Wp, 128) * 4
    out = _round_up(Hp, 8) * _round_up(Wp, 128) * 4
    # 2 inputs x 2 pipeline buffers, 2 output buffers, plus intermediates.
    return 4 * img + d_tmp + x_tmp + ph_b + z_tmp + 2 * out


def _pick_batch_block(B, per_image_bytes, budget_bytes):
    """Largest divisor of B under the VMEM budget; keep >= 2 grid steps and
    prefer an even step count so both v7x TensorCores stay busy."""
    max_bt = max(1, budget_bytes // max(1, per_image_bytes))
    if B >= 2:
        max_bt = min(max_bt, B // 2)
    max_bt = max(1, min(max_bt, B))
    divisors = [d for d in range(1, max_bt + 1) if B % d == 0]
    even = [d for d in divisors if (B // d) % 2 == 0]
    pool = even if even else divisors
    return max(pool) if pool else 1


def _l_spa_kernel(org_ref, enh_ref, ph_ref, pw_ref, e_ref, *, Bt, H, W, Hp, Wp):
    C = org_ref.shape[1]
    inv_c = 1.0 / C

    # d = mean_C(org) - mean_C(enhance): everything downstream is linear.
    d = (jnp.sum(org_ref[...], axis=1) - jnp.sum(enh_ref[...], axis=1)) * inv_c   # (Bt,H,W)

    # W-contraction: one flat matmul for the whole batch block.
    x = jnp.dot(d.reshape(Bt * H, W), pw_ref[...],
                preferred_element_type=jnp.float32)                                # (Bt*H, 3Wp)
    x = x.reshape(Bt, H, 3 * Wp)

    # H-contraction: one batched matmul (constant operator broadcast over Bt).
    ph_b = jnp.broadcast_to(ph_ref[...], (Bt, 3 * Hp, H))
    z = jnp.einsum('bph,bhw->bpw', ph_b, x,
                   preferred_element_type=jnp.float32)                             # (Bt,3Hp,3Wp)

    # Useful blocks of (PhAll @ d @ PwAll):
    #   rows [0:Hp]=PhS, [Hp:2Hp]=PhU, [2Hp:3Hp]=PhD
    #   cols [0:Wp]=PwS, [Wp:2Wp]=PwL, [2Wp:3Wp]=PwR
    l = z[:, 0:Hp, Wp:2 * Wp]
    r = z[:, 0:Hp, 2 * Wp:3 * Wp]
    u = z[:, Hp:2 * Hp, 0:Wp]
    dn = z[:, 2 * Hp:3 * Hp, 0:Wp]
    e = l * l + r * r + u * u + dn * dn                                            # (Bt,Hp,Wp)

    # Single whole-block store.
    e_ref[...] = e[:, None, :, :]


@jax.jit
def l_spa(org, enhance):
    B, C, H, W = org.shape
    Hp, Wp = H // 4, W // 4

    PH, PW = _make_stencil_constants(H, W)

    vmem_limit, budget, phys = _vmem_budget()
    per_image = _per_image_vmem_bytes(C, H, W)
    Bt = _pick_batch_block(B, per_image, budget)
    grid = (B // Bt,)
    # If a single image is already bigger than the budget (very large inputs),
    # raise the scoped limit as far as the hardware plausibly allows.
    vmem_limit = max(vmem_limit, min(Bt * per_image + (16 << 20), (phys * 7) // 8))

    flops = B * (3 * C * H * W
                 + 2 * H * W * (3 * Wp)
                 + 2 * (3 * Hp) * H * (3 * Wp)
                 + 8 * Hp * Wp)
    bytes_accessed = 4 * (2 * B * C * H * W + B * Hp * Wp + int(PH.size) + int(PW.size))

    kernel = functools.partial(_l_spa_kernel, Bt=Bt, H=H, W=W, Hp=Hp, Wp=Wp)
    return pl.pallas_call(
        kernel,
        out_shape=jax.ShapeDtypeStruct((B, 1, Hp, Wp), jnp.float32),
        grid_spec=pltpu.PrefetchScalarGridSpec(
            num_scalar_prefetch=0,
            grid=grid,
            in_specs=[
                pl.BlockSpec((Bt, C, H, W), lambda b: (b, 0, 0, 0)),
                pl.BlockSpec((Bt, C, H, W), lambda b: (b, 0, 0, 0)),
                # Constant operators: fixed block index -> fetched once, reused
                # across every grid step.
                pl.BlockSpec((3 * Hp, H), lambda b: (0, 0)),
                pl.BlockSpec((W, 3 * Wp), lambda b: (0, 0)),
            ],
            out_specs=pl.BlockSpec((Bt, 1, Hp, Wp), lambda b: (b, 0, 0, 0)),
        ),
        compiler_params=pltpu.CompilerParams(
            dimension_semantics=("parallel",),
            vmem_limit_bytes=int(vmem_limit)),
        cost_estimate=pl.CostEstimate(
            flops=int(flops), transcendentals=0, bytes_accessed=int(bytes_accessed)),
    )(org, enhance, PH, PW)


def l_spa_ref(org, enh):
    """Pure-JAX reference matching the PyTorch forward (returned value E)."""
    org_m = jnp.mean(org, axis=1, keepdims=True)
    enh_m = jnp.mean(enh, axis=1, keepdims=True)

    def pool(x):
        B, _, H, W = x.shape
        return x.reshape(B, 1, H // 4, 4, W // 4, 4).mean(axis=(3, 5))

    op, ep = pool(org_m), pool(enh_m)

    def diffs(p):
        H, W = p.shape[2], p.shape[3]
        pz = jnp.pad(p, ((0, 0), (0, 0), (1, 1), (1, 1)))
        left = p - pz[:, :, 1:H + 1, 0:W]
        right = p - pz[:, :, 1:H + 1, 2:W + 2]
        up = p - pz[:, :, 0:H, 1:W + 1]
        down = p - pz[:, :, 2:H + 2, 1:W + 1]
        return left, right, up, down

    ol, orr, ou, od = diffs(op)
    el, er, eu, ed = diffs(ep)
    return (ol - el) ** 2 + (orr - er) ** 2 + (ou - eu) ** 2 + (od - ed) ** 2


if __name__ == "__main__":
    key = jax.random.PRNGKey(0)
    k1, k2, k3, k4 = jax.random.split(key, 4)

    # Config 1: small shapes consistent with the module (Bt = 1, grid = 2).
    B, C, H, W = 2, 4, 16, 16
    org = jax.random.uniform(k1, (B, C, H, W), dtype=jnp.float32)
    enhance = jax.random.uniform(k2, (B, C, H, W), dtype=jnp.float32)
    out = l_spa(org, enhance)
    jax.block_until_ready(out)
    ref = l_spa_ref(org, enhance)
    assert out.shape == (B, 1, H // 4, W // 4)
    assert jnp.allclose(out, ref, atol=1e-5, rtol=1e-5), (
        f"max abs err {jnp.max(jnp.abs(out - ref))}")

    # Config 2: exercises the batched-block path (Bt = 2, grid = 2).
    B2, C2, H2, W2 = 4, 3, 32, 32
    org2 = jax.random.uniform(k3, (B2, C2, H2, W2), dtype=jnp.float32)
    enh2 = jax.random.uniform(k4, (B2, C2, H2, W2), dtype=jnp.float32)
    out2 = l_spa(org2, enh2)
    jax.block_until_ready(out2)
    ref2 = l_spa_ref(org2, enh2)
    assert out2.shape == (B2, 1, H2 // 4, W2 // 4)
    assert jnp.allclose(out2, ref2, atol=1e-5, rtol=1e-5), (
        f"max abs err {jnp.max(jnp.abs(out2 - ref2))}")

    print("KERNEL_OK")
</pallas_src>

<mosaic_0001>
module attributes {stable_mosaic.version = 11 : i64} {
  func.func @_l_spa_kernel(%arg0: i32, %arg1: memref<1x4x16x16xf32, #tpu.memory_space<vmem>>, %arg2: memref<1x4x16x16xf32, #tpu.memory_space<vmem>>, %arg3: memref<12x16xf32, #tpu.memory_space<vmem>>, %arg4: memref<16x12xf32, #tpu.memory_space<vmem>>, %arg5: memref<1x1x4x4xf32, #tpu.memory_space<vmem>>) attributes {dimension_semantics = [#tpu.dimension_semantics<parallel>], iteration_bounds = array<i64: 2>, scalar_prefetch = 0 : i64, scratch_operands = 0 : i64, tpu.core_type = #tpu.core_type<tc>, window_params = [{transform_indices = @transform_0, window_bounds = array<i64: 1, 4, 16, 16>}, {transform_indices = @transform_1, window_bounds = array<i64: 1, 4, 16, 16>}, {pipeline_mode = #tpu.pipeline_mode<synchronous>, transform_indices = @transform_2, window_bounds = array<i64: 12, 16>}, {pipeline_mode = #tpu.pipeline_mode<synchronous>, transform_indices = @transform_3, window_bounds = array<i64: 16, 12>}, {transform_indices = @transform_4, window_bounds = array<i64: 1, 1, 4, 4>}]} {
    %c0 = arith.constant 0 : index
    %c0_0 = arith.constant 0 : index
    %c0_1 = arith.constant 0 : index
    %c0_2 = arith.constant 0 : index
    %0 = vector.load %arg1[%c0, %c0_0, %c0_1, %c0_2] : memref<1x4x16x16xf32, #tpu.memory_space<vmem>>, vector<1x4x16x16xf32>
    %cst = arith.constant dense<0.000000e+00> : vector<1x16x16xf32>
    %1 = vector.multi_reduction <add>, %0, %cst [1] : vector<1x4x16x16xf32> to vector<1x16x16xf32>
    %c0_3 = arith.constant 0 : index
    %c0_4 = arith.constant 0 : index
    %c0_5 = arith.constant 0 : index
    %c0_6 = arith.constant 0 : index
    %2 = vector.load %arg2[%c0_3, %c0_4, %c0_5, %c0_6] : memref<1x4x16x16xf32, #tpu.memory_space<vmem>>, vector<1x4x16x16xf32>
    %cst_7 = arith.constant dense<0.000000e+00> : vector<1x16x16xf32>
    %3 = vector.multi_reduction <add>, %2, %cst_7 [1] : vector<1x4x16x16xf32> to vector<1x16x16xf32>
    %4 = arith.subf %1, %3 : vector<1x16x16xf32>
    %cst_8 = arith.constant 2.500000e-01 : f32
    %5 = vector.broadcast %cst_8 : f32 to vector<1x16x16xf32>
    %6 = arith.mulf %4, %5 : vector<1x16x16xf32>
    %7 = vector.shape_cast %6 : vector<1x16x16xf32> to vector<16x16xf32>
    %c0_9 = arith.constant 0 : index
    %c0_10 = arith.constant 0 : index
    %8 = vector.load %arg4[%c0_9, %c0_10] : memref<16x12xf32, #tpu.memory_space<vmem>>, vector<16x12xf32>
    %cst_11 = arith.constant dense<0.000000e+00> : vector<16x12xf32>
    %9 = tpu.matmul %7, %8, %cst_11 {dimension_numbers = #tpu.dot_dimension_numbers<[1], [0], [0], [1], [0, 0, 1, 1], [], []>} : vector<16x16xf32>, vector<16x12xf32>, vector<16x12xf32> -> vector<16x12xf32>
    %10 = vector.shape_cast %9 : vector<16x12xf32> to vector<1x16x12xf32>
    %c0_12 = arith.constant 0 : index
    %c0_13 = arith.constant 0 : index
    %11 = vector.load %arg3[%c0_12, %c0_13] : memref<12x16xf32, #tpu.memory_space<vmem>>, vector<12x16xf32>
    %12 = vector.shape_cast %11 : vector<12x16xf32> to vector<1x12x16xf32>
    "tpu.trace_start"() <{level = 10 : i32, message = "bph,bhw->bpw"}> : () -> ()
    %cst_14 = arith.constant dense<0.000000e+00> : vector<1x12x12xf32>
    %13 = tpu.matmul %12, %10, %cst_14 {dimension_numbers = #tpu.dot_dimension_numbers<[2], [1], [1], [2], [0, 0, 0, 1, 1, 2], [0], [0]>} : vector<1x12x16xf32>, vector<1x16x12xf32>, vector<1x12x12xf32> -> vector<1x12x12xf32>
    "tpu.trace_stop"() : () -> ()
    %14 = vector.extract_strided_slice %13 {offsets = [0, 0, 4], sizes = [1, 4, 4], strides = [1, 1, 1]} : vector<1x12x12xf32> to vector<1x4x4xf32>
    %15 = vector.extract_strided_slice %13 {offsets = [0, 0, 8], sizes = [1, 4, 4], strides = [1, 1, 1]} : vector<1x12x12xf32> to vector<1x4x4xf32>
    %16 = vector.extract_strided_slice %13 {offsets = [0, 4, 0], sizes = [1, 4, 4], strides = [1, 1, 1]} : vector<1x12x12xf32> to vector<1x4x4xf32>
    %17 = vector.extract_strided_slice %13 {offsets = [0, 8, 0], sizes = [1, 4, 4], strides = [1, 1, 1]} : vector<1x12x12xf32> to vector<1x4x4xf32>
    %18 = arith.mulf %14, %14 : vector<1x4x4xf32>
    %19 = arith.mulf %15, %15 : vector<1x4x4xf32>
    %20 = arith.addf %18, %19 : vector<1x4x4xf32>
    %21 = arith.mulf %16, %16 : vector<1x4x4xf32>
    %22 = arith.addf %20, %21 : vector<1x4x4xf32>
    %23 = arith.mulf %17, %17 : vector<1x4x4xf32>
    %24 = arith.addf %22, %23 : vector<1x4x4xf32>
    %25 = vector.shape_cast %24 : vector<1x4x4xf32> to vector<1x1x4x4xf32>
    %c0_15 = arith.constant 0 : index
    %c0_16 = arith.constant 0 : index
    %c0_17 = arith.constant 0 : index
    %c0_18 = arith.constant 0 : index
    %26 = vector.load %arg5[%c0_15, %c0_16, %c0_17, %c0_18] : memref<1x1x4x4xf32, #tpu.memory_space<vmem>>, vector<1x1x4x4xf32>
    tpu.vector_store %arg5[%c0_15, %c0_16, %c0_17, %c0_18], %25 {strides = array<i32>} : memref<1x1x4x4xf32, #tpu.memory_space<vmem>>, vector<1x1x4x4xf32>,
    return
  }
  func.func @transform_0(%arg0: i32) -> (i32, i32, i32, i32) {
    %c0_i32 = arith.constant 0 : i32
    %c0_i32_0 = arith.constant 0 : i32
    %c0_i32_1 = arith.constant 0 : i32
    %c0_i32_2 = arith.constant 0 : i32
    return %arg0, %c0_i32, %c0_i32_0, %c0_i32_1 : i32, i32, i32, i32
  }
  func.func @transform_1(%arg0: i32) -> (i32, i32, i32, i32) {
    %c0_i32 = arith.constant 0 : i32
    %c0_i32_0 = arith.constant 0 : i32
    %c0_i32_1 = arith.constant 0 : i32
    %c0_i32_2 = arith.constant 0 : i32
    return %arg0, %c0_i32, %c0_i32_0, %c0_i32_1 : i32, i32, i32, i32
  }
  func.func @transform_2(%arg0: i32) -> (i32, i32) {
    %c0_i32 = arith.constant 0 : i32
    %c0_i32_0 = arith.constant 0 : i32
    %c0_i32_1 = arith.constant 0 : i32
    return %c0_i32, %c0_i32_0 : i32, i32
  }
  func.func @transform_3(%arg0: i32) -> (i32, i32) {
    %c0_i32 = arith.constant 0 : i32
    %c0_i32_0 = arith.constant 0 : i32
    %c0_i32_1 = arith.constant 0 : i32
    return %c0_i32, %c0_i32_0 : i32, i32
  }
  func.func @transform_4(%arg0: i32) -> (i32, i32, i32, i32) {
    %c0_i32 = arith.constant 0 : i32
    %c0_i32_0 = arith.constant 0 : i32
    %c0_i32_1 = arith.constant 0 : i32
    %c0_i32_2 = arith.constant 0 : i32
    return %arg0, %c0_i32, %c0_i32_0, %c0_i32_1 : i32, i32, i32, i32
  }
}

</mosaic_0001>

<llo_original>
// kernel: l_spa.1
$region0: #{l_spa.1}
  #allocation0 [shape = 'u32[]', space=smem, size = 0x4, offset = 0x4, fixed_abs, tag = 'smem constant byte address 0x4 - core index']
  #allocation1 [shape = 'u32[72,128]{1,0:T(1,128)}', space=vmem, size = 0x9000, scoped, tag = 'internal scratch']
  %s0 = inlined_call_operand.hbm [shape: f32[2,4,16,16], index: 0, kind: input, shape index: {}]
  %s1 = inlined_call_operand.hbm [shape: f32[2,4,16,16], index: 1, kind: input, shape index: {}]
  %s2 = inlined_call_operand.hbm [shape: f32[12,16], index: 2, kind: input, shape index: {}]
  %s3 = inlined_call_operand.hbm [shape: f32[16,12], index: 3, kind: input, shape index: {}]
  %s4 = inlined_call_operand.hbm [shape: f32[2,1,4,4], index: 4, kind: output, shape index: {}]
  %s5 = sld [smem:[#allocation0]]
  $region65: #{l_spa.1} parent=0
    _
  %s7 = ssub.s32 1, %s5
  %s8 = scalar_select 0, %s7, %s5
  $region1: #{l_spa.1} parent=0
    #allocation2 [shape = 'u8[65536]{0}', space=vmem, size = 0x10000, scoped, tag = 'input window, operand 0']
    #allocation3 [shape = 's32[2]{0}', space=sflag, size = 0x8, scoped, tag = 'scoped memory for l_spa.1']
    #allocation4 [shape = 's32[2]{0}', space=sflag, size = 0x8, scoped, tag = 'scoped memory for l_spa.1']
    #allocation5 [shape = 'u8[65536]{0}', space=vmem, size = 0x10000, scoped, tag = 'input window, operand 1']
    #allocation6 [shape = 's32[2]{0}', space=sflag, size = 0x8, scoped, tag = 'scoped memory for l_spa.1']
    #allocation7 [shape = 'u8[8192]{0}', space=vmem, size = 0x2000, scoped, tag = 'input window, operand 2, single buffered']
    #allocation8 [shape = 'u8[8192]{0}', space=vmem, size = 0x2000, scoped, tag = 'input window, operand 3, single buffered']
    #allocation9 [shape = 's32[1]{0}', space=sflag, size = 0x4, scoped, tag = 'scoped memory for l_spa.1']
    #allocation10 [shape = 'u8[4096]{0}', space=vmem, size = 0x1000, scoped, tag = 'output window, operand 0']
    %9 = vsyncpa [#allocation3], 0
    %s10 = scalar_lea.sflag [#allocation3], 1
    %11 = vsyncpa %s10, 0
    %12 = vsyncpa [#allocation6], 0
    %s13 = scalar_lea.sflag [#allocation6], 1
    %14 = vsyncpa %s13, 0
    %15 = vsyncpa [#allocation9], 0
    %16 = vsyncpa [#allocation4], 0
    %s17 = scalar_lea.sflag [#allocation4], 1
    %18 = vsyncpa %s17, 0
    loop: start=0, step=1, limit=4
    $region2: #{l_spa.1} parent=1 // loop_pre_header
      _
    $region3: #{l_spa.1} parent=1 // loop_header
      %s20 = sphi 0, %s24
      %p21 = scmp.ge.s32.totalorder %s20, 4
      %s30 = sphi 0, %s32
      %s33 = sphi 0, %s30
      %s34 = sphi 0, %s33
      %s50 = sphi 0, %s34
      %s56 = sphi 0, %s58
      %s59 = sphi 0, %s56
      %s60 = sphi 0, %s59
      %s76 = sphi 0, %s60
      %s80 = sphi 0, %s80
      %s82 = sphi 0, %s80
      %s83 = sphi 0, %s82
      %s97 = sphi 0, %s83
      %s101 = sphi 0, %s101
      %s103 = sphi 0, %s101
      %s104 = sphi 0, %s103
      %s118 = sphi 0, %s104
      %s124 = sphi 0, %s126
      %s127 = sphi 0, %s124
      %s128 = sphi 0, %s127
      %s144 = sphi 0, %s128
    $region4: #{l_spa.1} parent=1 // loop_header_branch
      %23 = sbr.rel (%p21) target = $region8
    $region5: #{l_spa.1} parent=1 // loop_body
      %s25 = ssub.s32 %s20, 1
      %s26 = ssub.s32 %s20, 2
      %s27 = sadd.s32 %s20, 1
      %s28 = ssub.s32 %s20, %s27
      %p29 = scmp.eq.s32.totalorder %s28, 0
      %s31 = sadd.s32 %s30, 1
      %s32 = scalar_select %p29, %s30, %s31
      %p35 = pneg %p29
      %p36 = scmp.eq.s32.totalorder %s20, 1
      %p37 = por %p35, %p36
      %p38 = scmp.ne.s32.totalorder %s30, %s33
      %p39 = scmp.eq.s32.totalorder %s20, 0
      %p40 = por %p38, %p39
      %p41 = scmp.ne.s32.totalorder %s30, %s33
      %p42 = scmp.eq.s32.totalorder %s25, 1
      %p43 = por %p41, %p42
      %p44 = scmp.ne.s32.totalorder %s33, %s34
      %p45 = scmp.eq.s32.totalorder %s25, 0
      %p46 = por %p44, %p45
      %p47 = scmp.ne.s32.totalorder %s33, %s34
      %p48 = scmp.eq.s32.totalorder %s26, 1
      %p49 = por %p47, %p48
      %p51 = scmp.ne.s32.totalorder %s34, %s50
      %p52 = scmp.eq.s32.totalorder %s26, 0
      %p53 = por %p51, %p52
      %s54 = ssub.s32 %s20, %s27
      %p55 = scmp.eq.s32.totalorder %s54, 0
      %s57 = sadd.s32 %s56, 1
      %s58 = scalar_select %p55, %s56, %s57
      %p61 = pneg %p55
      %p62 = scmp.eq.s32.totalorder %s20, 1
      %p63 = por %p61, %p62
      %p64 = scmp.ne.s32.totalorder %s56, %s59
      %p65 = scmp.eq.s32.totalorder %s20, 0
      %p66 = por %p64, %p65
      %p67 = scmp.ne.s32.totalorder %s56, %s59
      %p68 = scmp.eq.s32.totalorder %s25, 1
      %p69 = por %p67, %p68
      %p70 = scmp.ne.s32.totalorder %s59, %s60
      %p71 = scmp.eq.s32.totalorder %s25, 0
      %p72 = por %p70, %p71
      %p73 = scmp.ne.s32.totalorder %s59, %s60
      %p74 = scmp.eq.s32.totalorder %s26, 1
      %p75 = por %p73, %p74
      %p77 = scmp.ne.s32.totalorder %s60, %s76
      %p78 = scmp.eq.s32.totalorder %s26, 0
      %p79 = por %p77, %p78
      %s81 = sadd.s32 %s80, 1
      %p84 = scmp.eq.s32.totalorder %s20, 1
      %p85 = scmp.ne.s32.totalorder %s80, %s82
      %p86 = scmp.eq.s32.totalorder %s20, 0
      %p87 = por %p85, %p86
      %p88 = scmp.ne.s32.totalorder %s80, %s82
      %p89 = scmp.eq.s32.totalorder %s25, 1
      %p90 = por %p88, %p89
      %p91 = scmp.ne.s32.totalorder %s82, %s83
      %p92 = scmp.eq.s32.totalorder %s25, 0
      %p93 = por %p91, %p92
      %p94 = scmp.ne.s32.totalorder %s82, %s83
      %p95 = scmp.eq.s32.totalorder %s26, 1
      %p96 = por %p94, %p95
      %p98 = scmp.ne.s32.totalorder %s83, %s97
      %p99 = scmp.eq.s32.totalorder %s26, 0
      %p100 = por %p98, %p99
      %s102 = sadd.s32 %s101, 1
      %p105 = scmp.eq.s32.totalorder %s20, 1
      %p106 = scmp.ne.s32.totalorder %s101, %s103
      %p107 = scmp.eq.s32.totalorder %s20, 0
      %p108 = por %p106, %p107
      %p109 = scmp.ne.s32.totalorder %s101, %s103
      %p110 = scmp.eq.s32.totalorder %s25, 1
      %p111 = por %p109, %p110
      %p112 = scmp.ne.s32.totalorder %s103, %s104
      %p113 = scmp.eq.s32.totalorder %s25, 0
      %p114 = por %p112, %p113
      %p115 = scmp.ne.s32.totalorder %s103, %s104
      %p116 = scmp.eq.s32.totalorder %s26, 1
      %p117 = por %p115, %p116
      %p119 = scmp.ne.s32.totalorder %s104, %s118
      %p120 = scmp.eq.s32.totalorder %s26, 0
      %p121 = por %p119, %p120
      %s122 = ssub.s32 %s20, %s27
      %p123 = scmp.eq.s32.totalorder %s122, 0
      %s125 = sadd.s32 %s124, 1
      %s126 = scalar_select %p123, %s124, %s125
      %p129 = pneg %p123
      %p130 = scmp.eq.s32.totalorder %s20, 1
      %p131 = por %p129, %p130
      %p132 = scmp.ne.s32.totalorder %s124, %s127
      %p133 = scmp.eq.s32.totalorder %s20, 0
      %p134 = por %p132, %p133
      %p135 = scmp.ne.s32.totalorder %s124, %s127
      %p136 = scmp.eq.s32.totalorder %s25, 1
      %p137 = por %p135, %p136
      %p138 = scmp.ne.s32.totalorder %s127, %s128
      %p139 = scmp.eq.s32.totalorder %s25, 0
      %p140 = por %p138, %p139
      %p141 = scmp.ne.s32.totalorder %s127, %s128
      %p142 = scmp.eq.s32.totalorder %s26, 1
      %p143 = por %p141, %p142
      %p145 = scmp.ne.s32.totalorder %s128, %s144
      %p146 = scmp.eq.s32.totalorder %s26, 0
      %p147 = por %p145, %p146
      %p148 = scmp.le.s32.totalorder 1, %s20
      %p149 = scmp.lt.s32.totalorder %s20, 3
      %p150 = pnand %p148, %p149
      %p151 = pneg %p150
      // Predicated region
      $region9: #{l_spa.1} parent=5 // pred_check
        _
      $region10: #{l_spa.1} parent=5 // pred_check_branch
        %153 = sbr.rel (%p150) target = $region12
      $region11: #{l_spa.1} parent=5 // pred_region
        %s154 = ssub.s32 %s20, 1
        // Predicated region
        $region13: #{l_spa.1} parent=11 // pred_check
          %p155 = pneg %p93
        $region14: #{l_spa.1} parent=11 // pred_check_branch
          %157 = sbr.rel (%p155) target = $region16
        $region15: #{l_spa.1} parent=11 // pred_region
          %159 = vsyncadd [#allocation6], 0
          %s160 = sshll.u32 %s2, 4
          %s161 = int_to_ptr.hbm [resolvable:$true] %s160
          %s162 = sshll.u32 [#allocation7], 4
          %s163 = int_to_ptr.vmem [resolvable:$true] %s162
          %168 = dma.hbm_to_vmem [thread:$0]  %s161, 256, %s163, [#allocation6], 128, 128, 8
        $region16: #{l_spa.1} parent=11 // pred_fallthru
          _
        // Predicated region
        $region17: #{l_spa.1} parent=11 // pred_check
          %p169 = pneg %p114
        $region18: #{l_spa.1} parent=11 // pred_check_branch
          %171 = sbr.rel (%p169) target = $region20
        $region19: #{l_spa.1} parent=11 // pred_region
          %173 = vsyncadd [#allocation9], 0
          %s174 = sshll.u32 %s3, 4
          %s175 = int_to_ptr.hbm [resolvable:$true] %s174
          %s176 = sshll.u32 [#allocation8], 4
          %s177 = int_to_ptr.vmem [resolvable:$true] %s176
          %182 = dma.hbm_to_vmem [thread:$0]  %s175, 256, %s177, [#allocation9], 128, 128, 8
        $region20: #{l_spa.1} parent=11 // pred_fallthru
          _
      $region12: #{l_spa.1} parent=5 // pred_fallthru
        _
      %p183 = scmp.lt.s32.totalorder %s20, 2
      // Predicated region
      $region21: #{l_spa.1} parent=5 // pred_check
        %p184 = pneg %p183
      $region22: #{l_spa.1} parent=5 // pred_check_branch
        %186 = sbr.rel (%p184) target = $region24
      $region23: #{l_spa.1} parent=5 // pred_region
        // Predicated region
        $region25: #{l_spa.1} parent=23 // pred_check
          %p187 = pneg %p40
        $region26: #{l_spa.1} parent=23 // pred_check_branch
          %189 = sbr.rel (%p187) target = $region28
        $region27: #{l_spa.1} parent=23 // pred_region
          %s190 = sand.u32 %s30, 1
          %s191 = scalar_lea.sflag [#allocation3], %s190
          %s192 = sand.u32 %s30, 1
          %s193 = smul.addr %s192, 64
          %s194 = scalar_lea.vmem [#allocation2], %s193
          %196 = vsyncadd %s191, 0
          %s197 = smul.addr %s20, 8
          %s198 = smul.addr %s197, 8
          %s199 = scalar_lea.hbm %s0, %s198
          %s200 = sshll.u32 %s199, 4
          %s201 = int_to_ptr.hbm [resolvable:$true] %s200
          %s202 = sshll.u32 %s194, 4
          %s203 = int_to_ptr.vmem [resolvable:$true] %s202
          %208 = dma.hbm_to_vmem [thread:$0]  %s201, 1024, %s203, %s191, 128, 128, 8
        $region28: #{l_spa.1} parent=23 // pred_fallthru
          _
        // Predicated region
        $region29: #{l_spa.1} parent=23 // pred_check
          %p209 = pneg %p66
        $region30: #{l_spa.1} parent=23 // pred_check_branch
          %211 = sbr.rel (%p209) target = $region32
        $region31: #{l_spa.1} parent=23 // pred_region
          %s212 = sand.u32 %s20, 1
          %s213 = scalar_lea.sflag [#allocation6], %s212
          %s214 = sand.u32 %s56, 1
          %s215 = smul.addr %s214, 64
          %s216 = scalar_lea.vmem [#allocation5], %s215
          %218 = vsyncadd %s213, 0
          %s219 = smul.addr %s20, 8
          %s220 = smul.addr %s219, 8
          %s221 = scalar_lea.hbm %s1, %s220
          %s222 = sshll.u32 %s221, 4
          %s223 = int_to_ptr.hbm [resolvable:$true] %s222
          %s224 = sshll.u32 %s216, 4
          %s225 = int_to_ptr.vmem [resolvable:$true] %s224
          %230 = dma.hbm_to_vmem [thread:$0]  %s223, 1024, %s225, %s213, 128, 128, 8
        $region32: #{l_spa.1} parent=23 // pred_fallthru
          _
      $region24: #{l_spa.1} parent=5 // pred_fallthru
        _
      %p231 = scmp.le.s32.totalorder 1, %s20
      %p232 = scmp.lt.s32.totalorder %s20, 3
      %p233 = pnand %p231, %p232
      %p234 = pneg %p233
      // Predicated region
      $region33: #{l_spa.1} parent=5 // pred_check
        _
      $region34: #{l_spa.1} parent=5 // pred_check_branch
        %236 = sbr.rel (%p233) target = $region36
      $region35: #{l_spa.1} parent=5 // pred_region
        %s237 = ssub.s32 %s20, 1
        %s238 = sand.u32 %s33, 1
        %s239 = scalar_lea.sflag [#allocation3], %s238
        %s240 = sand.u32 %s33, 1
        %s241 = smul.addr %s240, 64
        %s242 = scalar_lea.vmem [#allocation2], %s241
        // Predicated region
        $region37: #{l_spa.1} parent=35 // pred_check
          %p243 = pneg %p46
        $region38: #{l_spa.1} parent=35 // pred_check_branch
          %245 = sbr.rel (%p243) target = $region40
        $region39: #{l_spa.1} parent=35 // pred_region
          %247 = dma.done %s239, 1024
        $region40: #{l_spa.1} parent=35 // pred_fallthru
          _
        %s248 = sand.u32 %s25, 1
        %s249 = scalar_lea.sflag [#allocation6], %s248
        %s250 = sand.u32 %s59, 1
        %s251 = smul.addr %s250, 64
        %s252 = scalar_lea.vmem [#allocation5], %s251
        // Predicated region
        $region41: #{l_spa.1} parent=35 // pred_check
          %p253 = pneg %p72
        $region42: #{l_spa.1} parent=35 // pred_check_branch
          %255 = sbr.rel (%p253) target = $region44
        $region43: #{l_spa.1} parent=35 // pred_region
          %257 = dma.done %s249, 1024
        $region44: #{l_spa.1} parent=35 // pred_fallthru
          _
        // Predicated region
        $region45: #{l_spa.1} parent=35 // pred_check
          %p258 = pneg %p93
        $region46: #{l_spa.1} parent=35 // pred_check_branch
          %260 = sbr.rel (%p258) target = $region48
        $region47: #{l_spa.1} parent=35 // pred_region
          %262 = dma.done [#allocation6], 256
        $region48: #{l_spa.1} parent=35 // pred_fallthru
          _
        // Predicated region
        $region49: #{l_spa.1} parent=35 // pred_check
          %p263 = pneg %p114
        $region50: #{l_spa.1} parent=35 // pred_check_branch
          %265 = sbr.rel (%p263) target = $region52
        $region51: #{l_spa.1} parent=35 // pred_region
          %267 = dma.done [#allocation9], 256
        $region52: #{l_spa.1} parent=35 // pred_fallthru
          _
        %s268 = sand.u32 %s33, 1
        %s269 = scalar_lea.sflag [#allocation3], %s268
        %s270 = sand.u32 %s33, 1
        %s271 = smul.addr %s270, 64
        %s272 = scalar_lea.vmem [#allocation2], %s271
        %p273 = pneg %p46
        %p274 = pneg %p43
        %s275 = sand.u32 %s25, 1
        %s276 = scalar_lea.sflag [#allocation6], %s275
        %s277 = sand.u32 %s59, 1
        %s278 = smul.addr %s277, 64
        %s279 = scalar_lea.vmem [#allocation5], %s278
        %p280 = pneg %p72
        %p281 = pneg %p69
        %p282 = pneg %p93
        %p283 = pneg %p90
        %p284 = pneg %p114
        %p285 = pneg %p111
        %p286 = pneg %p140
        %p287 = pneg %p137
        %s288 = sand.u32 %s127, 1
        %s289 = scalar_lea.sflag [#allocation4], %s288
        %s290 = sand.u32 %s127, 1
        %s291 = smul.addr %s290, 4
        %s292 = scalar_lea.vmem [#allocation10], %s291
        %v293 = vld [vmem:[%s242] sm:$0xff]
        %v294 = vld [vmem:[%s242 + $0x8] sm:$0xff]
        %v295 = vld [vmem:[%s242 + $0x10] sm:$0xff]
        %v296 = vld [vmem:[%s242 + $0x18] sm:$0xff]
        %v297 = vld [vmem:[%s242 + $0x20] sm:$0xff]
        %v298 = vld [vmem:[%s242 + $0x28] sm:$0xff]
        %v299 = vld [vmem:[%s242 + $0x30] sm:$0xff]
        %v300 = vld [vmem:[%s242 + $0x38] sm:$0xff]
        %vm301 = vcmask 130048
        %v302 = vsel %vm301, %v293, 0.0
        %v303 = vsel %vm301, %v295, 0.0
        %v304 = vadd.f32 %v302, %v303
        %v305 = vsel %vm301, %v297, 0.0
        %v306 = vadd.f32 %v304, %v305
        %v307 = vsel %vm301, %v299, 0.0
        %v308 = vadd.f32 %v306, %v307
        %v309 = vsel %vm301, %v294, 0.0
        %v310 = vsel %vm301, %v296, 0.0
        %v311 = vadd.f32 %v309, %v310
        %v312 = vsel %vm301, %v298, 0.0
        %v313 = vadd.f32 %v311, %v312
        %v314 = vsel %vm301, %v300, 0.0
        %v315 = vadd.f32 %v313, %v314
        %v316 = vld [vmem:[%s252] sm:$0xff]
        %v317 = vld [vmem:[%s252 + $0x8] sm:$0xff]
        %v318 = vld [vmem:[%s252 + $0x10] sm:$0xff]
        %v319 = vld [vmem:[%s252 + $0x18] sm:$0xff]
        %v320 = vld [vmem:[%s252 + $0x20] sm:$0xff]
        %v321 = vld [vmem:[%s252 + $0x28] sm:$0xff]
        %v322 = vld [vmem:[%s252 + $0x30] sm:$0xff]
        %v323 = vld [vmem:[%s252 + $0x38] sm:$0xff]
        %v324 = vsel %vm301, %v316, 0.0
        %v325 = vsel %vm301, %v318, 0.0
        %v326 = vadd.f32 %v324, %v325
        %v327 = vsel %vm301, %v320, 0.0
        %v328 = vadd.f32 %v326, %v327
        %v329 = vsel %vm301, %v322, 0.0
        %v330 = vadd.f32 %v328, %v329
        %v331 = vsel %vm301, %v317, 0.0
        %v332 = vsel %vm301, %v319, 0.0
        %v333 = vadd.f32 %v331, %v332
        %v334 = vsel %vm301, %v321, 0.0
        %v335 = vadd.f32 %v333, %v334
        %v336 = vsel %vm301, %v323, 0.0
        %v337 = vadd.f32 %v335, %v336
        %v338 = vsub.f32 %v308, %v330
        %v339 = vsub.f32 %v315, %v337
        %v340 = vmul.f32 %v338, 0.25
        %v341 = vmul.f32 %v339, 0.25
        %v342 = vld [vmem:[#allocation8] sm:$0xff]
        %v343 = vld [vmem:[#allocation8 + $0x8] sm:$0xff]
        %v345 = vsel %vm301, %v340, 0
        %v348 = vsel %vm301, %v341, 0
        %350 = vmatpush.msra.mxu0 0.0
        %351 = vmatpush.msra.mxu0 0.0
        %352 = vmatpush.msra.mxu0 0.0
        %353 = vmatpush.msra.mxu0 0.0
        %354 = vmatpush.msra.mxu0 0.0
        %355 = vmatpush.msra.mxu0 0.0
        %356 = vmatpush.msra.mxu0 0.0
        %357 = vmatpush.msra.mxu0 0.0
        %358 = vmatpush.msra.mxu0 0.0
        %359 = vmatpush.msra.mxu0 0.0
        %360 = vmatpush.msra.mxu0 0.0
        %361 = vmatpush.msra.mxu0 0.0
        %362 = vmatpush.msra.mxu0 0.0
        %363 = vmatpush.msra.mxu0 0.0
        %364 = vmatpush.msra.mxu0 %v343
        %365 = vmatpush.msra.mxu0 %v342
        %366 = vmatmul.f32.gmra.mxu0 %v345
        %v367 = vpop.f32.mrf.mxu0
        %v368 = vadd.f32 0.0, %v367
        %369 = vmatmul.f32.gmra.mxu0 %v348
        %v370 = vpop.f32.mrf.mxu0
        %v371 = vadd.f32 0.0, %v370
        %372 = vdwg.mxu0
        %v373 = vld [vmem:[#allocation7] sm:$0xff]
        %v374 = vld [vmem:[#allocation7 + $0x8] sm:$0xf]
        %v376 = vsel %vm301, %v373, 0
        %v379 = vsel %vm301, %v374, 0
        %381 = vmatpush.msra.mxu0 0.0
        %382 = vmatpush.msra.mxu0 0.0
        %383 = vmatpush.msra.mxu0 0.0
        %384 = vmatpush.msra.mxu0 0.0
        %385 = vmatpush.msra.mxu0 0.0
        %386 = vmatpush.msra.mxu0 0.0
        %387 = vmatpush.msra.mxu0 0.0
        %388 = vmatpush.msra.mxu0 0.0
        %389 = vmatpush.msra.mxu0 0.0
        %390 = vmatpush.msra.mxu0 0.0
        %391 = vmatpush.msra.mxu0 0.0
        %392 = vmatpush.msra.mxu0 0.0
        %393 = vmatpush.msra.mxu0 0.0
        %394 = vmatpush.msra.mxu0 0.0
        %395 = vmatpush.msra.mxu0 %v371
        %396 = vmatpush.msra.mxu0 %v368
        %397 = vmatmul.f32.gmra.mxu0 %v376
        %v398 = vpop.f32.mrf.mxu0
        %v399 = vadd.f32 0.0, %v398
        %400 = vmatmul.f32.gmra.mxu0 %v379
        %v401 = vpop.f32.mrf.mxu0
        %v402 = vadd.f32 0.0, %v401
        %403 = vdwg.mxu0
        %v404 = vmul.f32 %v399, %v399
        %406 = vrot.lane.b32.xlu0 %v404, 124
        %v407 = vpop.permute.xlu0 %406
        %v409 = vadd.f32 %v404, %v407
        %v410 = vrot.slane %v404, 4
        %411 = vrot.lane.b32.xlu0 %v410, 4
        %v412 = vpop.permute.xlu0 %411
        %v414 = vadd.f32 %v409, %v412
        %v415 = vmul.f32 %v402, %v402
        %417 = vrot.lane.b32.xlu0 %v415, 4
        %v418 = vpop.permute.xlu0 %417
        %v420 = vadd.f32 %v414, %v418
        %422 = vrot.lane.b32.xlu0 %v420, 124
        %v423 = vpop.permute.xlu0 %422
        %vm425 = vcmask 27648
        %426 = vst.msk [vmem:[%s292] sm:$0xf] %vm425, %v423
        %s427 = sand.u32 %s127, 1
        %s428 = scalar_lea.sflag [#allocation4], %s427
        %s429 = sand.u32 %s127, 1
        %s430 = smul.addr %s429, 4
        %s431 = scalar_lea.vmem [#allocation10], %s430
        // Predicated region
        $region53: #{l_spa.1} parent=35 // pred_check
          %p432 = pneg %p137
        $region54: #{l_spa.1} parent=35 // pred_check_branch
          %434 = sbr.rel (%p432) target = $region56
        $region55: #{l_spa.1} parent=35 // pred_region
          %436 = vsyncadd %s428, 0
          %s437 = smul.addr %s25, 4
          %s438 = scalar_lea.hbm %s4, %s437
          %s440 = sshll.u32 %s431, 4
          %s441 = int_to_ptr.vmem [resolvable:$true] %s440
          %s442 = sshll.u32 %s438, 4
          %s443 = int_to_ptr.hbm [resolvable:$true] %s442
          %445 = dma.vmem_to_hbm [thread:$0]  %s441, 64, %s443, %s428
        $region56: #{l_spa.1} parent=35 // pred_fallthru
          _
      $region36: #{l_spa.1} parent=5 // pred_fallthru
        _
      %p446 = scmp.le.s32.totalorder 2, %s20
      // Predicated region
      $region57: #{l_spa.1} parent=5 // pred_check
        %p447 = pneg %p446
      $region58: #{l_spa.1} parent=5 // pred_check_branch
        %449 = sbr.rel (%p447) target = $region60
      $region59: #{l_spa.1} parent=5 // pred_region
        %s450 = ssub.s32 %s20, 2
        // Predicated region
        $region61: #{l_spa.1} parent=59 // pred_check
          %p451 = pneg %p143
        $region62: #{l_spa.1} parent=59 // pred_check_branch
          %453 = sbr.rel (%p451) target = $region64
        $region63: #{l_spa.1} parent=59 // pred_region
          %s454 = sand.u32 %s128, 1
          %s455 = scalar_lea.sflag [#allocation4], %s454
          %s456 = sand.u32 %s128, 1
          %s457 = smul.addr %s456, 4
          %s458 = scalar_lea.vmem [#allocation10], %s457
          %460 = dma.done %s455, 64
        $region64: #{l_spa.1} parent=59 // pred_fallthru
          _
      $region60: #{l_spa.1} parent=5 // pred_fallthru
        _
    $region6: #{l_spa.1} parent=1 // loop_footer
      %s24 = sadd.s32 1, %s20
    $region7: #{l_spa.1} parent=1 // loop_footer_branch
      %19 = sbr.rel target = $region3
    $region8: #{l_spa.1} parent=1 // loop_exit
      _
    %461 = vsyncpa [#allocation3], 1
    %s462 = scalar_lea.sflag [#allocation3], 1
    %463 = vsyncpa %s462, 1
    %464 = vsyncpa [#allocation6], 1
    %s465 = scalar_lea.sflag [#allocation6], 1
    %466 = vsyncpa %s465, 1
    %467 = vsyncpa [#allocation9], 1
    %468 = vsyncpa [#allocation4], 1
    %s469 = scalar_lea.sflag [#allocation4], 1
    %470 = vsyncpa %s469, 1

</llo_original>
